<compile_context>
chip_gen: v7x
topology: tpu7x:2x2x1
jax: 0.10.0
libtpu: 0.0.40
codegen_flags: <defaults>
</compile_context>

<pallas_src>
from functools import partial

import jax
import jax.numpy as jnp
from jax.experimental import pallas as pl
from jax.experimental.pallas import tpu as pltpu

PAD = 128  # lane width every layer is padded to (keep at 128, see notes above)


def mlp_kernel(x_ref, w_ref, b_ref, o_ref, *, in_dim, out_dim):
    """Fused padded MLP forward for one batch tile.

    x_ref: (tile_b, PAD) f32   -- block over a (B_pad, in_dim) array; lanes >= in_dim are
                                  out-of-bounds padding (undefined) and are masked to 0 here.
    w_ref: (L, PAD, PAD) f32   -- packed, zero-padded weights ((in, out) layout), resident.
    b_ref: (L, 1, PAD)  f32    -- packed, zero-padded biases, resident.
    o_ref: (tile_b, out_dim) f32 -- narrow output block (masked store).
    """
    # Zero the padded / OOB lanes of the input block (cheap VPU iota + select).
    lane = jax.lax.broadcasted_iota(jnp.int32, x_ref.shape, dimension=1)
    h = jnp.where(lane < in_dim, x_ref[...], 0.0)          # (tile_b, PAD) f32

    n_layers = w_ref.shape[0]                               # static (4) -> unrolled
    for l in range(n_layers):
        z = jnp.dot(h, w_ref[l], preferred_element_type=jnp.float32)  # f32 MXU matmul
        z = z + b_ref[l]                                    # broadcast (1, PAD) bias
        h = jnp.maximum(z, 0.0) if l < n_layers - 1 else z  # ReLU on hidden layers only

    o_ref[...] = h[:, :out_dim].astype(o_ref.dtype)         # narrow (masked) store


def _round_up(n, m):
    return ((n + m - 1) // m) * m


def _choose_tile_b(B):
    b8 = _round_up(max(B, 1), 8)
    if b8 <= 256:
        return b8  # tiny batch: single step; dispatch/prologue-bound anyway
    # Large tiles amortize the ~0.35 us/step overhead (>=512 rows ~ 85%+ of HBM roofline),
    # capped at 2048 rows and clamped so the grid keeps >=4 steps -- the single "parallel"
    # grid axis is what shards work across v7x's 2 TensorCores.
    return max(8, min(2048, _round_up(-(-b8 // 4), 8)))


def pack_params(params, pad=PAD, dtype=jnp.float32):
    """Pack per-layer (W[in,out], b) into zero-padded (L,pad,pad) / (L,1,pad) f32 blobs."""
    L = len(params)
    w_packed = jnp.zeros((L, pad, pad), dtype)
    b_packed = jnp.zeros((L, 1, pad), dtype)
    for l, (w, b) in enumerate(params):
        fin, fout = w.shape
        w_packed = w_packed.at[l, :fin, :fout].set(w.astype(dtype))
        b_packed = b_packed.at[l, 0, :fout].set(jnp.reshape(b, (-1,)).astype(dtype))
    return w_packed, b_packed


def simple_model_forward(x, params, *, tile_b=None):
    """x: (B, input_dim) f32. params: list of (W[in,out], b[1,out]) (i.e. PyTorch W^T)."""
    B, in_dim = x.shape
    out_dim = params[-1][0].shape[1]
    assert in_dim <= PAD and out_dim <= PAD
    assert all(w.shape[0] <= PAD and w.shape[1] <= PAD for (w, _) in params)

    w_packed, b_packed = pack_params(params)

    if tile_b is None:
        tile_b = _choose_tile_b(B)
    tile_b = max(8, _round_up(tile_b, 8))
    B_pad = _round_up(max(B, 1), tile_b)

    # Only a tiny row-pad of the narrow (B, in_dim) input; no 128-lane slab in HBM.
    x_p = x.astype(jnp.float32)
    if B_pad != B:
        x_p = jnp.pad(x_p, ((0, B_pad - B), (0, 0)))

    grid = (B_pad // tile_b,)

    # Cost hint reflects what the kernel actually does (padded matmuls, narrow I/O).
    flops = 2 * B_pad * len(params) * PAD * PAD
    bytes_accessed = (B_pad * in_dim * 4 + B_pad * out_dim * 4
                      + int(w_packed.size) * 4 + int(b_packed.size) * 4)

    out = pl.pallas_call(
        partial(mlp_kernel, in_dim=in_dim, out_dim=out_dim),
        out_shape=jax.ShapeDtypeStruct((B_pad, out_dim), jnp.float32),
        grid_spec=pltpu.PrefetchScalarGridSpec(
            num_scalar_prefetch=0,
            grid=grid,
            in_specs=[
                # 128-wide block over the narrow (B_pad, in_dim) array: only the valid
                # in_dim columns are DMA'd; OOB lanes are masked in-kernel.
                pl.BlockSpec((tile_b, PAD), lambda i: (i, 0)),
                # Constant index_map => fetched into VMEM once and resident for all steps.
                pl.BlockSpec(w_packed.shape, lambda i: (0, 0, 0)),
                pl.BlockSpec(b_packed.shape, lambda i: (0, 0, 0)),
            ],
            # Narrow output block: last dim equals the full array dim (masked vst is fine,
            # the store slot has enormous slack; cuts writeback 64x vs a 128-lane f32 slab).
            out_specs=pl.BlockSpec((tile_b, out_dim), lambda i: (i, 0)),
        ),
        compiler_params=pltpu.CompilerParams(
            dimension_semantics=("parallel",)),
        cost_estimate=pl.CostEstimate(
            flops=flops, transcendentals=0, bytes_accessed=bytes_accessed),
    )(x_p, w_packed, b_packed)

    return out[:B] if B_pad != B else out


def init_params(key, input_dim=10, hidden_dims=(128, 64, 32), output_dim=2):
    """Deterministic init mimicking PyTorch nn.Linear default (U(-1/sqrt(fan_in), +))."""
    dims = [input_dim] + list(hidden_dims) + [output_dim]
    params = []
    for i in range(len(dims) - 1):
        fan_in, fan_out = dims[i], dims[i + 1]
        key, kw, kb = jax.random.split(key, 3)
        bound = 1.0 / jnp.sqrt(jnp.float32(fan_in))
        # Stored as (in, out): equivalent to PyTorch's W^T.
        w = jax.random.uniform(kw, (fan_in, fan_out), jnp.float32, -bound, bound)
        b = jax.random.uniform(kb, (1, fan_out), jnp.float32, -bound, bound)
        params.append((w, b))
    return params


def reference_forward(x, params):
    h = x
    for i, (w, b) in enumerate(params):
        h = h @ w + b
        if i < len(params) - 1:
            h = jnp.maximum(h, 0.0)
    return h


if __name__ == "__main__":
    key = jax.random.PRNGKey(0)
    k_param, k_x1, k_x2 = jax.random.split(key, 3)

    input_dim, hidden_dims, output_dim = 10, (128, 64, 32), 2
    params = init_params(k_param, input_dim, hidden_dims, output_dim)

    # Small batch (single tile, single grid step).
    x_small = jax.random.normal(k_x1, (8, input_dim), jnp.float32)
    out_small = jax.block_until_ready(simple_model_forward(x_small, params))
    ref_small = reference_forward(x_small, params)
    assert out_small.shape == (8, output_dim)
    assert jnp.allclose(out_small, ref_small, atol=2e-2, rtol=2e-2), \
        "mismatch vs JAX reference (small batch)"

    # Non-divisible batch exercising row padding + multi-step (4-step) parallel grid.
    x_big = jax.random.normal(k_x2, (300, input_dim), jnp.float32)
    out_big = jax.block_until_ready(simple_model_forward(x_big, params))
    ref_big = reference_forward(x_big, params)
    assert out_big.shape == (300, output_dim)
    assert jnp.allclose(out_big, ref_big, atol=2e-2, rtol=2e-2), \
        "mismatch vs JAX reference (large batch)"

    print("KERNEL_OK")
</pallas_src>

<mosaic_0001>
module attributes {stable_mosaic.version = 11 : i64} {
  func.func @mlp_kernel(%arg0: i32, %arg1: memref<8x128xf32, #tpu.memory_space<vmem>>, %arg2: memref<4x128x128xf32, #tpu.memory_space<vmem>>, %arg3: memref<4x1x128xf32, #tpu.memory_space<vmem>>, %arg4: memref<8x2xf32, #tpu.memory_space<vmem>>) attributes {dimension_semantics = [#tpu.dimension_semantics<parallel>], iteration_bounds = array<i64: 1>, scalar_prefetch = 0 : i64, scratch_operands = 0 : i64, tpu.core_type = #tpu.core_type<tc>, window_params = [{transform_indices = @transform_0, window_bounds = array<i64: 8, 128>}, {pipeline_mode = #tpu.pipeline_mode<synchronous>, transform_indices = @transform_1, window_bounds = array<i64: 4, 128, 128>}, {pipeline_mode = #tpu.pipeline_mode<synchronous>, transform_indices = @transform_2, window_bounds = array<i64: 4, 1, 128>}, {transform_indices = @transform_3, window_bounds = array<i64: 8, 2>}]} {
    %0 = tpu.iota {dimensions = array<i32: 1>} : vector<8x128xi32>
    %c10_i32 = arith.constant 10 : i32
    %1 = vector.broadcast %c10_i32 : i32 to vector<8x128xi32>
    %2 = arith.cmpi slt, %0, %1 : vector<8x128xi32>
    %c0 = arith.constant 0 : index
    %c0_0 = arith.constant 0 : index
    %3 = vector.load %arg1[%c0, %c0_0] : memref<8x128xf32, #tpu.memory_space<vmem>>, vector<8x128xf32>
    %cst = arith.constant 0.000000e+00 : f32
    %4 = vector.broadcast %cst : f32 to vector<8x128xf32>
    %5 = arith.select %2, %3, %4 : vector<8x128xi1>, vector<8x128xf32>
    %c0_1 = arith.constant 0 : index
    %c0_2 = arith.constant 0 : index
    %c0_3 = arith.constant 0 : index
    %6 = vector.load %arg2[%c0_1, %c0_2, %c0_3] : memref<4x128x128xf32, #tpu.memory_space<vmem>>, vector<1x128x128xf32>
    %7 = vector.shape_cast %6 : vector<1x128x128xf32> to vector<128x128xf32>
    %cst_4 = arith.constant dense<0.000000e+00> : vector<8x128xf32>
    %8 = tpu.matmul %5, %7, %cst_4 {dimension_numbers = #tpu.dot_dimension_numbers<[1], [0], [0], [1], [0, 0, 1, 1], [], []>} : vector<8x128xf32>, vector<128x128xf32>, vector<8x128xf32> -> vector<8x128xf32>
    %c0_5 = arith.constant 0 : index
    %c0_6 = arith.constant 0 : index
    %c0_7 = arith.constant 0 : index
    %9 = vector.load %arg3[%c0_5, %c0_6, %c0_7] : memref<4x1x128xf32, #tpu.memory_space<vmem>>, vector<1x1x128xf32>
    %10 = vector.shape_cast %9 : vector<1x1x128xf32> to vector<1x128xf32>
    %11 = vector.broadcast %10 : vector<1x128xf32> to vector<8x128xf32>
    %12 = arith.addf %8, %11 : vector<8x128xf32>
    %cst_8 = arith.constant 0.000000e+00 : f32
    %13 = vector.broadcast %cst_8 : f32 to vector<8x128xf32>
    %14 = arith.maximumf %12, %13 : vector<8x128xf32>
    %c1 = arith.constant 1 : index
    %c0_9 = arith.constant 0 : index
    %c0_10 = arith.constant 0 : index
    %15 = vector.load %arg2[%c1, %c0_9, %c0_10] : memref<4x128x128xf32, #tpu.memory_space<vmem>>, vector<1x128x128xf32>
    %16 = vector.shape_cast %15 : vector<1x128x128xf32> to vector<128x128xf32>
    %cst_11 = arith.constant dense<0.000000e+00> : vector<8x128xf32>
    %17 = tpu.matmul %14, %16, %cst_11 {dimension_numbers = #tpu.dot_dimension_numbers<[1], [0], [0], [1], [0, 0, 1, 1], [], []>} : vector<8x128xf32>, vector<128x128xf32>, vector<8x128xf32> -> vector<8x128xf32>
    %c1_12 = arith.constant 1 : index
    %c0_13 = arith.constant 0 : index
    %c0_14 = arith.constant 0 : index
    %18 = vector.load %arg3[%c1_12, %c0_13, %c0_14] : memref<4x1x128xf32, #tpu.memory_space<vmem>>, vector<1x1x128xf32>
    %19 = vector.shape_cast %18 : vector<1x1x128xf32> to vector<1x128xf32>
    %20 = vector.broadcast %19 : vector<1x128xf32> to vector<8x128xf32>
    %21 = arith.addf %17, %20 : vector<8x128xf32>
    %cst_15 = arith.constant 0.000000e+00 : f32
    %22 = vector.broadcast %cst_15 : f32 to vector<8x128xf32>
    %23 = arith.maximumf %21, %22 : vector<8x128xf32>
    %c2 = arith.constant 2 : index
    %c0_16 = arith.constant 0 : index
    %c0_17 = arith.constant 0 : index
    %24 = vector.load %arg2[%c2, %c0_16, %c0_17] : memref<4x128x128xf32, #tpu.memory_space<vmem>>, vector<1x128x128xf32>
    %25 = vector.shape_cast %24 : vector<1x128x128xf32> to vector<128x128xf32>
    %cst_18 = arith.constant dense<0.000000e+00> : vector<8x128xf32>
    %26 = tpu.matmul %23, %25, %cst_18 {dimension_numbers = #tpu.dot_dimension_numbers<[1], [0], [0], [1], [0, 0, 1, 1], [], []>} : vector<8x128xf32>, vector<128x128xf32>, vector<8x128xf32> -> vector<8x128xf32>
    %c2_19 = arith.constant 2 : index
    %c0_20 = arith.constant 0 : index
    %c0_21 = arith.constant 0 : index
    %27 = vector.load %arg3[%c2_19, %c0_20, %c0_21] : memref<4x1x128xf32, #tpu.memory_space<vmem>>, vector<1x1x128xf32>
    %28 = vector.shape_cast %27 : vector<1x1x128xf32> to vector<1x128xf32>
    %29 = vector.broadcast %28 : vector<1x128xf32> to vector<8x128xf32>
    %30 = arith.addf %26, %29 : vector<8x128xf32>
    %cst_22 = arith.constant 0.000000e+00 : f32
    %31 = vector.broadcast %cst_22 : f32 to vector<8x128xf32>
    %32 = arith.maximumf %30, %31 : vector<8x128xf32>
    %c3 = arith.constant 3 : index
    %c0_23 = arith.constant 0 : index
    %c0_24 = arith.constant 0 : index
    %33 = vector.load %arg2[%c3, %c0_23, %c0_24] : memref<4x128x128xf32, #tpu.memory_space<vmem>>, vector<1x128x128xf32>
    %34 = vector.shape_cast %33 : vector<1x128x128xf32> to vector<128x128xf32>
    %cst_25 = arith.constant dense<0.000000e+00> : vector<8x128xf32>
    %35 = tpu.matmul %32, %34, %cst_25 {dimension_numbers = #tpu.dot_dimension_numbers<[1], [0], [0], [1], [0, 0, 1, 1], [], []>} : vector<8x128xf32>, vector<128x128xf32>, vector<8x128xf32> -> vector<8x128xf32>
    %c3_26 = arith.constant 3 : index
    %c0_27 = arith.constant 0 : index
    %c0_28 = arith.constant 0 : index
    %36 = vector.load %arg3[%c3_26, %c0_27, %c0_28] : memref<4x1x128xf32, #tpu.memory_space<vmem>>, vector<1x1x128xf32>
    %37 = vector.shape_cast %36 : vector<1x1x128xf32> to vector<1x128xf32>
    %38 = vector.broadcast %37 : vector<1x128xf32> to vector<8x128xf32>
    %39 = arith.addf %35, %38 : vector<8x128xf32>
    %40 = vector.extract_strided_slice %39 {offsets = [0, 0], sizes = [8, 2], strides = [1, 1]} : vector<8x128xf32> to vector<8x2xf32>
    %c0_29 = arith.constant 0 : index
    %c0_30 = arith.constant 0 : index
    %41 = vector.load %arg4[%c0_29, %c0_30] : memref<8x2xf32, #tpu.memory_space<vmem>>, vector<8x2xf32>
    tpu.vector_store %arg4[%c0_29, %c0_30], %40 {strides = array<i32>} : memref<8x2xf32, #tpu.memory_space<vmem>>, vector<8x2xf32>,
    return
  }
  func.func @transform_0(%arg0: i32) -> (i32, i32) {
    %c0_i32 = arith.constant 0 : i32
    %c0_i32_0 = arith.constant 0 : i32
    return %arg0, %c0_i32 : i32, i32
  }
  func.func @transform_1(%arg0: i32) -> (i32, i32, i32) {
    %c0_i32 = arith.constant 0 : i32
    %c0_i32_0 = arith.constant 0 : i32
    %c0_i32_1 = arith.constant 0 : i32
    %c0_i32_2 = arith.constant 0 : i32
    return %c0_i32, %c0_i32_0, %c0_i32_1 : i32, i32, i32
  }
  func.func @transform_2(%arg0: i32) -> (i32, i32, i32) {
    %c0_i32 = arith.constant 0 : i32
    %c0_i32_0 = arith.constant 0 : i32
    %c0_i32_1 = arith.constant 0 : i32
    %c0_i32_2 = arith.constant 0 : i32
    return %c0_i32, %c0_i32_0, %c0_i32_1 : i32, i32, i32
  }
  func.func @transform_3(%arg0: i32) -> (i32, i32) {
    %c0_i32 = arith.constant 0 : i32
    %c0_i32_0 = arith.constant 0 : i32
    return %arg0, %c0_i32 : i32, i32
  }
}

</mosaic_0001>

<llo_original>
// kernel: tpu_custom_call.1
$region0: #{tpu_custom_call.1}
  #allocation0 [shape = 'u32[]', space=smem, size = 0x4, offset = 0x4, fixed_abs, tag = 'smem constant byte address 0x4 - core index']
  #allocation1 [shape = 'u32[144,128]{1,0:T(1,128)}', space=vmem, size = 0x12000, scoped, tag = 'internal scratch']
  %s0 = inlined_call_operand.hbm [shape: f32[8,10], index: 0, kind: input, shape index: {}]
  %s1 = inlined_call_operand.hbm [shape: f32[4,128,128], index: 1, kind: input, shape index: {}]
  %s2 = inlined_call_operand.vmem [shape: f32[4,1,128], index: 2, kind: input, shape index: {}]
  %s3 = inlined_call_operand.vmem [shape: f32[8,2], index: 3, kind: output, shape index: {}]
  %s4 = sld [smem:[#allocation0]]
  $region30: #{tpu_custom_call.1} parent=0
    _
  %s6 = ssub.s32 1, %s4
  %s7 = scalar_select 0, %s6, %s4
  $region1: #{tpu_custom_call.1} parent=0
    #allocation2 [shape = 'u8[4096]{0}', space=vmem, size = 0x1000, scoped, tag = 'input window, operand 0, single buffered']
    #allocation3 [shape = 's32[1]{0}', space=sflag, size = 0x4, scoped, tag = 'scoped memory for tpu_custom_call.1']
    #allocation4 [shape = 'u8[262144]{0}', space=vmem, size = 0x40000, scoped, tag = 'input window, operand 1, single buffered']
    #allocation5 [shape = 's32[1]{0}', space=sflag, size = 0x4, scoped, tag = 'scoped memory for tpu_custom_call.1']
    %8 = vsyncpa [#allocation3], 0
    %9 = vsyncpa [#allocation5], 0
    // Predicated region
    $region2: #{tpu_custom_call.1} parent=1 // pred_check
      _
    $region3: #{tpu_custom_call.1} parent=1 // pred_check_branch
      %11 = sbr.rel (0) target = $region5
    $region4: #{tpu_custom_call.1} parent=1 // pred_region
      %s13 = ssub.s32 128, 128
      %14 = vsyncadd [#allocation3], %s13
      %s16 = sshll.u32 [#allocation2], 4
      %s17 = int_to_ptr.vmem [resolvable:$true] %s16
      %19 = dma.hbm_to_vmem [thread:$0]  %s0, 128, %s17, [#allocation3]
    $region5: #{tpu_custom_call.1} parent=1 // pred_fallthru
      _
    // Predicated region
    $region6: #{tpu_custom_call.1} parent=1 // pred_check
      _
    $region7: #{tpu_custom_call.1} parent=1 // pred_check_branch
      %21 = sbr.rel (0) target = $region9
    $region8: #{tpu_custom_call.1} parent=1 // pred_region
      %s23 = ssub.s32 8192, 8192
      %24 = vsyncadd [#allocation5], %s23
      %s25 = sshll.u32 [#allocation4], 4
      %s26 = int_to_ptr.vmem [resolvable:$true] %s25
      %31 = dma.hbm_to_vmem [thread:$0]  %s1, 8192, %s26, [#allocation5], 128, 128, 8
    $region9: #{tpu_custom_call.1} parent=1 // pred_fallthru
      _
    // Predicated region
    $region10: #{tpu_custom_call.1} parent=1 // pred_check
      _
    $region11: #{tpu_custom_call.1} parent=1 // pred_check_branch
      %33 = sbr.rel (0) target = $region13
    $region12: #{tpu_custom_call.1} parent=1 // pred_region
      _
    $region13: #{tpu_custom_call.1} parent=1 // pred_fallthru
      _
    // Predicated region
    $region14: #{tpu_custom_call.1} parent=1 // pred_check
      _
    $region15: #{tpu_custom_call.1} parent=1 // pred_check_branch
      %35 = sbr.rel (0) target = $region17
    $region16: #{tpu_custom_call.1} parent=1 // pred_region
      %36 = dma.done [#allocation3], 128
    $region17: #{tpu_custom_call.1} parent=1 // pred_fallthru
      _
    // Predicated region
    $region18: #{tpu_custom_call.1} parent=1 // pred_check
      _
    $region19: #{tpu_custom_call.1} parent=1 // pred_check_branch
      %38 = sbr.rel (0) target = $region21
    $region20: #{tpu_custom_call.1} parent=1 // pred_region
      %39 = dma.done [#allocation5], 8192
    $region21: #{tpu_custom_call.1} parent=1 // pred_fallthru
      _
    %v40 = vlaneseq
    %v41 = vand.u32 %v40, 127
    %vm42 = vcmp.lt.s32.totalorder %v41, 10
    %v43 = vld [vmem:[#allocation2] sm:$0xff]
    %v44 = vsel %vm42, %v43, 0.0
    %v45 = vld [vmem:[#allocation4] sm:$0xff]
    %v46 = vld [vmem:[#allocation4 + $0x8] sm:$0xff]
    %v47 = vld [vmem:[#allocation4 + $0x10] sm:$0xff]
    %v48 = vld [vmem:[#allocation4 + $0x18] sm:$0xff]
    %v49 = vld [vmem:[#allocation4 + $0x20] sm:$0xff]
    %v50 = vld [vmem:[#allocation4 + $0x28] sm:$0xff]
    %v51 = vld [vmem:[#allocation4 + $0x30] sm:$0xff]
    %v52 = vld [vmem:[#allocation4 + $0x38] sm:$0xff]
    %v53 = vld [vmem:[#allocation4 + $0x40] sm:$0xff]
    %v54 = vld [vmem:[#allocation4 + $0x48] sm:$0xff]
    %v55 = vld [vmem:[#allocation4 + $0x50] sm:$0xff]
    %v56 = vld [vmem:[#allocation4 + $0x58] sm:$0xff]
    %v57 = vld [vmem:[#allocation4 + $0x60] sm:$0xff]
    %v58 = vld [vmem:[#allocation4 + $0x68] sm:$0xff]
    %v59 = vld [vmem:[#allocation4 + $0x70] sm:$0xff]
    %v60 = vld [vmem:[#allocation4 + $0x78] sm:$0xff]
    %v61 = vld [vmem:[%s2] sm:$0x1]
    %v63 = vlaneseq
    %v64 = vshrl.u32 %v63, 7
    %v65 = vsub.s32 0, %v64
    %v66 = vrot.slane %v61, %v65
    %68 = vmatprep.subr.mxu0 0.0
    %69 = vmatpush1.msra.mxu0 %v45
    %70 = vmatprep.subr.mxu0 0.0
    %71 = vmatpush1.msra.mxu0 %v46
    %72 = vmatprep.subr.mxu0 0.0
    %73 = vmatpush1.msra.mxu0 %v47
    %74 = vmatprep.subr.mxu0 0.0
    %75 = vmatpush1.msra.mxu0 %v48
    %76 = vmatprep.subr.mxu0 0.0
    %77 = vmatpush1.msra.mxu0 %v49
    %78 = vmatprep.subr.mxu0 0.0
    %79 = vmatpush1.msra.mxu0 %v50
    %80 = vmatprep.subr.mxu0 0.0
    %81 = vmatpush1.msra.mxu0 %v51
    %82 = vmatprep.subr.mxu0 0.0
    %83 = vmatpush1.msra.mxu0 %v52
    %84 = vmatprep.subr.mxu0 0.0
    %85 = vmatpush1.msra.mxu0 %v53
    %86 = vmatprep.subr.mxu0 0.0
    %87 = vmatpush1.msra.mxu0 %v54
    %88 = vmatprep.subr.mxu0 0.0
    %89 = vmatpush1.msra.mxu0 %v55
    %90 = vmatprep.subr.mxu0 0.0
    %91 = vmatpush1.msra.mxu0 %v56
    %92 = vmatprep.subr.mxu0 0.0
    %93 = vmatpush1.msra.mxu0 %v57
    %94 = vmatprep.subr.mxu0 0.0
    %95 = vmatpush1.msra.mxu0 %v58
    %96 = vmatprep.subr.mxu0 0.0
    %97 = vmatpush1.msra.mxu0 %v59
    %98 = vmatprep.subr.mxu0 0.0
    %99 = vmatpush1.msra.mxu0 %v60
    %100 = vmatprep.subr.mxu0 0.0
    %101 = vmatpush1.msra.mxu0 0.0
    %102 = vmatprep.subr.mxu0 0.0
    %103 = vmatpush1.msra.mxu0 0.0
    %104 = vmatprep.subr.mxu0 0.0
    %105 = vmatpush1.msra.mxu0 0.0
    %106 = vmatprep.subr.mxu0 0.0
    %107 = vmatpush1.msra.mxu0 0.0
    %108 = vmatprep.subr.mxu0 0.0
    %109 = vmatpush1.msra.mxu0 0.0
    %110 = vmatprep.subr.mxu0 0.0
    %111 = vmatpush1.msra.mxu0 0.0
    %112 = vmatprep.subr.mxu0 0.0
    %113 = vmatpush1.msra.mxu0 0.0
    %114 = vmatprep.subr.mxu0 0.0
    %115 = vmatpush1.msra.mxu0 0.0
    %116 = vmatprep.subr.mxu0 0.0
    %117 = vmatpush1.msra.mxu0 0.0
    %118 = vmatprep.subr.mxu0 0.0
    %119 = vmatpush1.msra.mxu0 0.0
    %120 = vmatprep.subr.mxu0 0.0
    %121 = vmatpush1.msra.mxu0 0.0
    %122 = vmatprep.subr.mxu0 0.0
    %123 = vmatpush1.msra.mxu0 0.0
    %124 = vmatprep.subr.mxu0 0.0
    %125 = vmatpush1.msra.mxu0 0.0
    %126 = vmatprep.subr.mxu0 0.0
    %127 = vmatpush1.msra.mxu0 0.0
    %128 = vmatprep.subr.mxu0 0.0
    %129 = vmatpush1.msra.mxu0 0.0
    %130 = vmatprep.subr.mxu0 0.0
    %131 = vmatpush1.msra.mxu0 0.0
    %132 = vmatprep.mubr.f32.mxu0 0.0
    %133 = vmatmul.mubr.f32.gmra.mrb[0].mxu0 %v44
    %v134 = vpop.f32.mrb[0].mxu0
    %v135 = vadd.f32 %v66, %v134
    %v136 = vpop.f32.mrb[0].mxu0
    %137 = vdwg.mxu0
    %v138 = vmax.f32 %v135, 0.0
    %s139 = scalar_lea.vmem [#allocation4], 128
    %v140 = vld [vmem:[%s139] sm:$0xff]
    %v141 = vld [vmem:[%s139 + $0x8] sm:$0xff]
    %v142 = vld [vmem:[%s139 + $0x10] sm:$0xff]
    %v143 = vld [vmem:[%s139 + $0x18] sm:$0xff]
    %v144 = vld [vmem:[%s139 + $0x20] sm:$0xff]
    %v145 = vld [vmem:[%s139 + $0x28] sm:$0xff]
    %v146 = vld [vmem:[%s139 + $0x30] sm:$0xff]
    %v147 = vld [vmem:[%s139 + $0x38] sm:$0xff]
    %v148 = vld [vmem:[%s139 + $0x40] sm:$0xff]
    %v149 = vld [vmem:[%s139 + $0x48] sm:$0xff]
    %v150 = vld [vmem:[%s139 + $0x50] sm:$0xff]
    %v151 = vld [vmem:[%s139 + $0x58] sm:$0xff]
    %v152 = vld [vmem:[%s139 + $0x60] sm:$0xff]
    %v153 = vld [vmem:[%s139 + $0x68] sm:$0xff]
    %v154 = vld [vmem:[%s139 + $0x70] sm:$0xff]
    %v155 = vld [vmem:[%s139 + $0x78] sm:$0xff]
    %s156 = scalar_lea.vmem %s2, 1
    %v157 = vld [vmem:[%s156] sm:$0x1]
    %v159 = vlaneseq
    %v160 = vshrl.u32 %v159, 7
    %v161 = vsub.s32 0, %v160
    %v162 = vrot.slane %v157, %v161
    %164 = vmatprep.subr.mxu0 0.0
    %165 = vmatpush1.msra.mxu0 %v140
    %166 = vmatprep.subr.mxu0 0.0
    %167 = vmatpush1.msra.mxu0 %v141
    %168 = vmatprep.subr.mxu0 0.0
    %169 = vmatpush1.msra.mxu0 %v142
    %170 = vmatprep.subr.mxu0 0.0
    %171 = vmatpush1.msra.mxu0 %v143
    %172 = vmatprep.subr.mxu0 0.0
    %173 = vmatpush1.msra.mxu0 %v144
    %174 = vmatprep.subr.mxu0 0.0
    %175 = vmatpush1.msra.mxu0 %v145
    %176 = vmatprep.subr.mxu0 0.0
    %177 = vmatpush1.msra.mxu0 %v146
    %178 = vmatprep.subr.mxu0 0.0
    %179 = vmatpush1.msra.mxu0 %v147
    %180 = vmatprep.subr.mxu0 0.0
    %181 = vmatpush1.msra.mxu0 %v148
    %182 = vmatprep.subr.mxu0 0.0
    %183 = vmatpush1.msra.mxu0 %v149
    %184 = vmatprep.subr.mxu0 0.0
    %185 = vmatpush1.msra.mxu0 %v150
    %186 = vmatprep.subr.mxu0 0.0
    %187 = vmatpush1.msra.mxu0 %v151
    %188 = vmatprep.subr.mxu0 0.0
    %189 = vmatpush1.msra.mxu0 %v152
    %190 = vmatprep.subr.mxu0 0.0
    %191 = vmatpush1.msra.mxu0 %v153
    %192 = vmatprep.subr.mxu0 0.0
    %193 = vmatpush1.msra.mxu0 %v154
    %194 = vmatprep.subr.mxu0 0.0
    %195 = vmatpush1.msra.mxu0 %v155
    %196 = vmatprep.subr.mxu0 0.0
    %197 = vmatpush1.msra.mxu0 0.0
    %198 = vmatprep.subr.mxu0 0.0
    %199 = vmatpush1.msra.mxu0 0.0
    %200 = vmatprep.subr.mxu0 0.0
    %201 = vmatpush1.msra.mxu0 0.0
    %202 = vmatprep.subr.mxu0 0.0
    %203 = vmatpush1.msra.mxu0 0.0
    %204 = vmatprep.subr.mxu0 0.0
    %205 = vmatpush1.msra.mxu0 0.0
    %206 = vmatprep.subr.mxu0 0.0
    %207 = vmatpush1.msra.mxu0 0.0
    %208 = vmatprep.subr.mxu0 0.0
    %209 = vmatpush1.msra.mxu0 0.0
    %210 = vmatprep.subr.mxu0 0.0
    %211 = vmatpush1.msra.mxu0 0.0
    %212 = vmatprep.subr.mxu0 0.0
    %213 = vmatpush1.msra.mxu0 0.0
    %214 = vmatprep.subr.mxu0 0.0
    %215 = vmatpush1.msra.mxu0 0.0
    %216 = vmatprep.subr.mxu0 0.0
    %217 = vmatpush1.msra.mxu0 0.0
    %218 = vmatprep.subr.mxu0 0.0
    %219 = vmatpush1.msra.mxu0 0.0
    %220 = vmatprep.subr.mxu0 0.0
    %221 = vmatpush1.msra.mxu0 0.0
    %222 = vmatprep.subr.mxu0 0.0
    %223 = vmatpush1.msra.mxu0 0.0
    %224 = vmatprep.subr.mxu0 0.0
    %225 = vmatpush1.msra.mxu0 0.0
    %226 = vmatprep.subr.mxu0 0.0
    %227 = vmatpush1.msra.mxu0 0.0
    %228 = vmatprep.mubr.f32.mxu0 0.0
    %229 = vmatmul.mubr.f32.gmra.mrb[0].mxu0 %v138
    %v230 = vpop.f32.mrb[0].mxu0
    %v231 = vadd.f32 %v162, %v230
    %v232 = vpop.f32.mrb[0].mxu0
    %233 = vdwg.mxu0
    %v234 = vmax.f32 %v231, 0.0
    %s235 = scalar_lea.vmem [#allocation4], 256
    %v236 = vld [vmem:[%s235] sm:$0xff]
    %v237 = vld [vmem:[%s235 + $0x8] sm:$0xff]
    %v238 = vld [vmem:[%s235 + $0x10] sm:$0xff]
    %v239 = vld [vmem:[%s235 + $0x18] sm:$0xff]
    %v240 = vld [vmem:[%s235 + $0x20] sm:$0xff]
    %v241 = vld [vmem:[%s235 + $0x28] sm:$0xff]
    %v242 = vld [vmem:[%s235 + $0x30] sm:$0xff]
    %v243 = vld [vmem:[%s235 + $0x38] sm:$0xff]
    %v244 = vld [vmem:[%s235 + $0x40] sm:$0xff]
    %v245 = vld [vmem:[%s235 + $0x48] sm:$0xff]
    %v246 = vld [vmem:[%s235 + $0x50] sm:$0xff]
    %v247 = vld [vmem:[%s235 + $0x58] sm:$0xff]
    %v248 = vld [vmem:[%s235 + $0x60] sm:$0xff]
    %v249 = vld [vmem:[%s235 + $0x68] sm:$0xff]
    %v250 = vld [vmem:[%s235 + $0x70] sm:$0xff]
    %v251 = vld [vmem:[%s235 + $0x78] sm:$0xff]
    %s252 = scalar_lea.vmem %s2, 2
    %v253 = vld [vmem:[%s252] sm:$0x1]
    %v255 = vlaneseq
    %v256 = vshrl.u32 %v255, 7
    %v257 = vsub.s32 0, %v256
    %v258 = vrot.slane %v253, %v257
    %260 = vmatprep.subr.mxu0 0.0
    %261 = vmatpush1.msra.mxu0 %v236
    %262 = vmatprep.subr.mxu0 0.0
    %263 = vmatpush1.msra.mxu0 %v237
    %264 = vmatprep.subr.mxu0 0.0
    %265 = vmatpush1.msra.mxu0 %v238
    %266 = vmatprep.subr.mxu0 0.0
    %267 = vmatpush1.msra.mxu0 %v239
    %268 = vmatprep.subr.mxu0 0.0
    %269 = vmatpush1.msra.mxu0 %v240
    %270 = vmatprep.subr.mxu0 0.0
    %271 = vmatpush1.msra.mxu0 %v241
    %272 = vmatprep.subr.mxu0 0.0
    %273 = vmatpush1.msra.mxu0 %v242
    %274 = vmatprep.subr.mxu0 0.0
    %275 = vmatpush1.msra.mxu0 %v243
    %276 = vmatprep.subr.mxu0 0.0
    %277 = vmatpush1.msra.mxu0 %v244
    %278 = vmatprep.subr.mxu0 0.0
    %279 = vmatpush1.msra.mxu0 %v245
    %280 = vmatprep.subr.mxu0 0.0
    %281 = vmatpush1.msra.mxu0 %v246
    %282 = vmatprep.subr.mxu0 0.0
    %283 = vmatpush1.msra.mxu0 %v247
    %284 = vmatprep.subr.mxu0 0.0
    %285 = vmatpush1.msra.mxu0 %v248
    %286 = vmatprep.subr.mxu0 0.0
    %287 = vmatpush1.msra.mxu0 %v249
    %288 = vmatprep.subr.mxu0 0.0
    %289 = vmatpush1.msra.mxu0 %v250
    %290 = vmatprep.subr.mxu0 0.0
    %291 = vmatpush1.msra.mxu0 %v251
    %292 = vmatprep.subr.mxu0 0.0
    %293 = vmatpush1.msra.mxu0 0.0
    %294 = vmatprep.subr.mxu0 0.0
    %295 = vmatpush1.msra.mxu0 0.0
    %296 = vmatprep.subr.mxu0 0.0
    %297 = vmatpush1.msra.mxu0 0.0
    %298 = vmatprep.subr.mxu0 0.0
    %299 = vmatpush1.msra.mxu0 0.0
    %300 = vmatprep.subr.mxu0 0.0
    %301 = vmatpush1.msra.mxu0 0.0
    %302 = vmatprep.subr.mxu0 0.0
    %303 = vmatpush1.msra.mxu0 0.0
    %304 = vmatprep.subr.mxu0 0.0
    %305 = vmatpush1.msra.mxu0 0.0
    %306 = vmatprep.subr.mxu0 0.0
    %307 = vmatpush1.msra.mxu0 0.0
    %308 = vmatprep.subr.mxu0 0.0
    %309 = vmatpush1.msra.mxu0 0.0
    %310 = vmatprep.subr.mxu0 0.0
    %311 = vmatpush1.msra.mxu0 0.0
    %312 = vmatprep.subr.mxu0 0.0
    %313 = vmatpush1.msra.mxu0 0.0
    %314 = vmatprep.subr.mxu0 0.0
    %315 = vmatpush1.msra.mxu0 0.0
    %316 = vmatprep.subr.mxu0 0.0
    %317 = vmatpush1.msra.mxu0 0.0
    %318 = vmatprep.subr.mxu0 0.0
    %319 = vmatpush1.msra.mxu0 0.0
    %320 = vmatprep.subr.mxu0 0.0
    %321 = vmatpush1.msra.mxu0 0.0
    %322 = vmatprep.subr.mxu0 0.0
    %323 = vmatpush1.msra.mxu0 0.0
    %324 = vmatprep.mubr.f32.mxu0 0.0
    %325 = vmatmul.mubr.f32.gmra.mrb[0].mxu0 %v234
    %v326 = vpop.f32.mrb[0].mxu0
    %v327 = vadd.f32 %v258, %v326
    %v328 = vpop.f32.mrb[0].mxu0
    %329 = vdwg.mxu0
    %v330 = vmax.f32 %v327, 0.0
    %s331 = scalar_lea.vmem [#allocation4], 384
    %v332 = vld [vmem:[%s331] sm:$0xff]
    %v333 = vld [vmem:[%s331 + $0x8] sm:$0xff]
    %v334 = vld [vmem:[%s331 + $0x10] sm:$0xff]
    %v335 = vld [vmem:[%s331 + $0x18] sm:$0xff]
    %v336 = vld [vmem:[%s331 + $0x20] sm:$0xff]
    %v337 = vld [vmem:[%s331 + $0x28] sm:$0xff]
    %v338 = vld [vmem:[%s331 + $0x30] sm:$0xff]
    %v339 = vld [vmem:[%s331 + $0x38] sm:$0xff]
    %v340 = vld [vmem:[%s331 + $0x40] sm:$0xff]
    %v341 = vld [vmem:[%s331 + $0x48] sm:$0xff]
    %v342 = vld [vmem:[%s331 + $0x50] sm:$0xff]
    %v343 = vld [vmem:[%s331 + $0x58] sm:$0xff]
    %v344 = vld [vmem:[%s331 + $0x60] sm:$0xff]
    %v345 = vld [vmem:[%s331 + $0x68] sm:$0xff]
    %v346 = vld [vmem:[%s331 + $0x70] sm:$0xff]
    %v347 = vld [vmem:[%s331 + $0x78] sm:$0xff]
    %s348 = scalar_lea.vmem %s2, 3
    %v349 = vld [vmem:[%s348] sm:$0x1]
    %v351 = vlaneseq
    %v352 = vshrl.u32 %v351, 7
    %v353 = vsub.s32 0, %v352
    %v354 = vrot.slane %v349, %v353
    %356 = vmatprep.subr.mxu0 0.0
    %357 = vmatpush1.msra.mxu0 %v332
    %358 = vmatprep.subr.mxu0 0.0
    %359 = vmatpush1.msra.mxu0 %v333
    %360 = vmatprep.subr.mxu0 0.0
    %361 = vmatpush1.msra.mxu0 %v334
    %362 = vmatprep.subr.mxu0 0.0
    %363 = vmatpush1.msra.mxu0 %v335
    %364 = vmatprep.subr.mxu0 0.0
    %365 = vmatpush1.msra.mxu0 %v336
    %366 = vmatprep.subr.mxu0 0.0
    %367 = vmatpush1.msra.mxu0 %v337
    %368 = vmatprep.subr.mxu0 0.0
    %369 = vmatpush1.msra.mxu0 %v338
    %370 = vmatprep.subr.mxu0 0.0
    %371 = vmatpush1.msra.mxu0 %v339
    %372 = vmatprep.subr.mxu0 0.0
    %373 = vmatpush1.msra.mxu0 %v340
    %374 = vmatprep.subr.mxu0 0.0
    %375 = vmatpush1.msra.mxu0 %v341
    %376 = vmatprep.subr.mxu0 0.0
    %377 = vmatpush1.msra.mxu0 %v342
    %378 = vmatprep.subr.mxu0 0.0
    %379 = vmatpush1.msra.mxu0 %v343
    %380 = vmatprep.subr.mxu0 0.0
    %381 = vmatpush1.msra.mxu0 %v344
    %382 = vmatprep.subr.mxu0 0.0
    %383 = vmatpush1.msra.mxu0 %v345
    %384 = vmatprep.subr.mxu0 0.0
    %385 = vmatpush1.msra.mxu0 %v346
    %386 = vmatprep.subr.mxu0 0.0
    %387 = vmatpush1.msra.mxu0 %v347
    %388 = vmatprep.subr.mxu0 0.0
    %389 = vmatpush1.msra.mxu0 0.0
    %390 = vmatprep.subr.mxu0 0.0
    %391 = vmatpush1.msra.mxu0 0.0
    %392 = vmatprep.subr.mxu0 0.0
    %393 = vmatpush1.msra.mxu0 0.0
    %394 = vmatprep.subr.mxu0 0.0
    %395 = vmatpush1.msra.mxu0 0.0
    %396 = vmatprep.subr.mxu0 0.0
    %397 = vmatpush1.msra.mxu0 0.0
    %398 = vmatprep.subr.mxu0 0.0
    %399 = vmatpush1.msra.mxu0 0.0
    %400 = vmatprep.subr.mxu0 0.0
    %401 = vmatpush1.msra.mxu0 0.0
    %402 = vmatprep.subr.mxu0 0.0
    %403 = vmatpush1.msra.mxu0 0.0
    %404 = vmatprep.subr.mxu0 0.0
    %405 = vmatpush1.msra.mxu0 0.0
    %406 = vmatprep.subr.mxu0 0.0
    %407 = vmatpush1.msra.mxu0 0.0
    %408 = vmatprep.subr.mxu0 0.0
    %409 = vmatpush1.msra.mxu0 0.0
    %410 = vmatprep.subr.mxu0 0.0
    %411 = vmatpush1.msra.mxu0 0.0
    %412 = vmatprep.subr.mxu0 0.0
    %413 = vmatpush1.msra.mxu0 0.0
    %414 = vmatprep.subr.mxu0 0.0
    %415 = vmatpush1.msra.mxu0 0.0
    %416 = vmatprep.subr.mxu0 0.0
    %417 = vmatpush1.msra.mxu0 0.0
    %418 = vmatprep.subr.mxu0 0.0
    %419 = vmatpush1.msra.mxu0 0.0
    %420 = vmatprep.mubr.f32.mxu0 0.0
    %421 = vmatmul.mubr.f32.gmra.mrb[0].mxu0 %v330
    %v422 = vpop.f32.mrb[0].mxu0
    %v423 = vadd.f32 %v354, %v422
    %v424 = vpop.f32.mrb[0].mxu0
    %425 = vdwg.mxu0
    %vm426 = vcmask 15360
    %427 = vst.msk [vmem:[%s3] sm:$0xff] %vm426, %v423
    // Predicated region
    $region22: #{tpu_custom_call.1} parent=1 // pred_check
      _
    $region23: #{tpu_custom_call.1} parent=1 // pred_check_branch
      %429 = sbr.rel (0) target = $region25
    $region24: #{tpu_custom_call.1} parent=1 // pred_region
      _
    $region25: #{tpu_custom_call.1} parent=1 // pred_fallthru
      _
    // Predicated region
    $region26: #{tpu_custom_call.1} parent=1 // pred_check
      _
    $region27: #{tpu_custom_call.1} parent=1 // pred_check_branch
      %431 = sbr.rel (0) target = $region29
    $region28: #{tpu_custom_call.1} parent=1 // pred_region
      _
    $region29: #{tpu_custom_call.1} parent=1 // pred_fallthru
      _
    %432 = vsyncpa [#allocation3], 1
    %433 = vsyncpa [#allocation5], 1

</llo_original>
